<compile_context>
chip_gen: v7x
topology: tpu7x:2x2x1
jax: 0.10.0
libtpu: 0.0.40
codegen_flags: <defaults>
</compile_context>

<pallas_src>
import jax
import jax.numpy as jnp
from jax.experimental import pallas as pl
from jax.experimental.pallas import tpu as pltpu

_HIGH = jax.lax.Precision.HIGHEST


def _round_up(x, m):
    return ((x + m - 1) // m) * m


def _pad2d(a, rows, cols):
    r, c = a.shape
    return jnp.pad(a, ((0, rows - r), (0, cols - c)))


def _make_kernel(bc_pad):
    def kernel(xv_ref, xr_ref, w_ref, ind_ref, out_ref, sv_ref, sr_ref):
        j = pl.program_id(0)

        @pl.when(j == 0)
        def _init():
            # ViT-branch input is small (size*size lanes) -> one resident block,
            # reduced once. Raw-pixel accumulator starts at zero.
            sv_ref[...] = jnp.sum(xv_ref[...], axis=-1, keepdims=True)
            sr_ref[...] = jnp.zeros_like(sr_ref)

        # Streamed raw-pixel tile: per-(b,c)-row spatial partial sum (lane reduce).
        sr_ref[...] += jnp.sum(xr_ref[...], axis=-1, keepdims=True)

        @pl.when(j == pl.num_programs(0) - 1)
        def _finalize():
            w = w_ref[...]                              # (2*bc_pad + 8, Npad)
            wv = w[:bc_pad, :]                          # folded ViT weights per row
            wy = w[bc_pad:2 * bc_pad, :]                # folded YOLO weights per row
            beff = w[2 * bc_pad:2 * bc_pad + 1, :]      # folded bias
            # Per-row contribution (VPU broadcast-multiply), then a single tiny
            # matmul with a 0/1 batch-grouping matrix sums channels per batch.
            contrib = sv_ref[...] * wv + sr_ref[...] * wy       # (bc_pad, Npad)
            out_ref[...] = jnp.dot(ind_ref[...], contrib,
                                   preferred_element_type=jnp.float32) + beff

    return kernel


def meta_model_forward(pixel_values, labels, params, *, size=16, lane_tile=512):
    """Mirror MetaModel.forward. `labels` only feed the (discarded) ViT loss."""
    del labels
    B, C, H, W = pixel_values.shape
    x = pixel_values.astype(jnp.float32)

    # --- val_transform glue: Resize(size) + CenterCrop(size); Normalize is folded
    # into the kernel weights below. ---
    # TODO(synk): torchvision Resize uses antialiased bilinear; plain bilinear here.
    scale = size / min(H, W)
    new_h, new_w = int(round(H * scale)), int(round(W * scale))
    vit_in = jax.image.resize(x, (B, C, new_h, new_w), method="bilinear")
    top = (new_h - size) // 2
    left = (new_w - size) // 2
    vit_in = vit_in[:, :, top:top + size, left:left + size]

    Sv = size * size          # true ViT spatial count
    Sr = H * W                # true raw spatial count

    mean = params["image_mean"].reshape(C).astype(jnp.float32)
    std = params["image_std"].reshape(C).astype(jnp.float32)
    wv, bv = params["w_vit"], params["b_vit"].reshape(1, -1)
    wy, by = params["w_yolo"], params["b_yolo"].reshape(1, -1)
    wf, bf = params["w_fc"], params["b_fc"].reshape(1, -1)
    num_classes = wf.shape[1]

    # --- exact algebraic fold: normalize + heads + concat + fc -> 2 weights, 1 bias ---
    wf_v, wf_y = wf[:2, :], wf[2:, :]
    wv_fold = jnp.dot(wv, wf_v, precision=_HIGH)                  # (C, N)
    wy_fold = jnp.dot(wy, wf_y, precision=_HIGH)                  # (C, N)
    wv_eff = wv_fold / (std[:, None] * Sv)                        # folds mean-pool + 1/std
    wy_eff = wy_fold / Sr                                         # folds mean-pool
    b_eff = (jnp.dot(-(mean / std)[None, :], wv_fold, precision=_HIGH)
             + jnp.dot(bv, wf_v, precision=_HIGH)
             + jnp.dot(by, wf_y, precision=_HIGH)
             + bf)                                                # (1, N)

    # --- dense, lane-aligned 2-D layouts ---
    BC = B * C
    BC_pad = _round_up(BC, 8)                      # sublane-dense rows
    Npad = _round_up(num_classes, 128)             # lane-dense output
    Sv_pad = _round_up(Sv, 128)
    Sr_pad = _round_up(Sr, lane_tile)
    n_tiles = Sr_pad // lane_tile

    xv2d = _pad2d(vit_in.reshape(BC, Sv), BC_pad, Sv_pad)         # zero-padded
    xr2d = _pad2d(x.reshape(BC, Sr), BC_pad, Sr_pad)              # zero-padded

    # Per-row expanded weights: row b*C + c holds the channel-c effective weights.
    wv_big = _pad2d(jnp.tile(wv_eff, (B, 1)), BC_pad, Npad)
    wy_big = _pad2d(jnp.tile(wy_eff, (B, 1)), BC_pad, Npad)
    b_row = _pad2d(b_eff, 8, Npad)
    w_pack = jnp.concatenate([wv_big, wy_big, b_row], axis=0)     # (2*BC_pad + 8, Npad)

    # 0/1 batch-grouping matrix: ind[b, r] = 1 iff row r belongs to batch b.
    rows = jnp.arange(BC_pad)
    ind = ((rows[None, :] // C == jnp.arange(B)[:, None]) &
           (rows[None, :] < BC)).astype(jnp.float32)              # (B, BC_pad)

    out_pad = pl.pallas_call(
        _make_kernel(BC_pad),
        out_shape=jax.ShapeDtypeStruct((B, Npad), jnp.float32),
        grid_spec=pltpu.PrefetchScalarGridSpec(
            num_scalar_prefetch=0,
            grid=(n_tiles,),
            in_specs=[
                pl.BlockSpec((BC_pad, Sv_pad), lambda j: (0, 0)),      # ViT slab (resident)
                pl.BlockSpec((BC_pad, lane_tile), lambda j: (0, j)),   # raw pixels (streamed)
                pl.BlockSpec(w_pack.shape, lambda j: (0, 0)),          # packed weights + bias
                pl.BlockSpec((B, BC_pad), lambda j: (0, 0)),           # batch-grouping matrix
            ],
            out_specs=pl.BlockSpec((B, Npad), lambda j: (0, 0)),
            scratch_shapes=[pltpu.VMEM((BC_pad, 1), jnp.float32),      # ViT spatial sums
                            pltpu.VMEM((BC_pad, 1), jnp.float32)],     # raw spatial sums
        ),
        compiler_params=pltpu.CompilerParams(
            dimension_semantics=("arbitrary",),        # spatial axis is a reduction
            vmem_limit_bytes=64 * 1024 * 1024,
        ),
    )(xv2d, xr2d, w_pack, ind)

    return out_pad[:, :num_classes]


def _reference(pixel_values, params, *, size=16):
    """Pure-JAX reference with the un-folded math (matches the PyTorch module + stubs)."""
    B, C, H, W = pixel_values.shape
    x = pixel_values.astype(jnp.float32)
    scale = size / min(H, W)
    new_h, new_w = int(round(H * scale)), int(round(W * scale))
    vit_in = jax.image.resize(x, (B, C, new_h, new_w), method="bilinear")
    top = (new_h - size) // 2
    left = (new_w - size) // 2
    vit_in = vit_in[:, :, top:top + size, left:left + size]

    mean = params["image_mean"].reshape(1, C, 1)
    std = params["image_std"].reshape(1, C, 1)
    xvn = (vit_in.reshape(B, C, -1) - mean) / std
    feat_v = xvn.mean(-1)
    vit_logits = jnp.dot(feat_v, params["w_vit"], precision=_HIGH) + params["b_vit"]
    feat_y = x.reshape(B, C, -1).mean(-1)
    yolo_logits = jnp.dot(feat_y, params["w_yolo"], precision=_HIGH) + params["b_yolo"]
    comb = jnp.concatenate([vit_logits, yolo_logits], axis=1)
    return jnp.dot(comb, params["w_fc"], precision=_HIGH) + params["b_fc"]


if __name__ == "__main__":
    key = jax.random.PRNGKey(0)
    k_px, k_wv, k_wy, k_wf = jax.random.split(key, 4)

    B, C, H, W = 2, 3, 20, 20
    size = 16
    num_classes = 8

    pixel_values = jax.random.uniform(k_px, (B, C, H, W), dtype=jnp.float32)
    labels = jnp.zeros((B,), dtype=jnp.int32)  # present in signature; loss is discarded

    params = {
        "image_mean": jnp.array([0.5, 0.5, 0.5], jnp.float32),
        "image_std": jnp.array([0.5, 0.5, 0.5], jnp.float32),
        # TODO(synk): real ViT / YOLO backbones are external pretrained networks;
        # stubbed as deterministic pool+linear heads producing 2 logits each
        # (so concat gives the 4 features expected by fc = Linear(4, num_classes)).
        "w_vit": 0.1 * jax.random.normal(k_wv, (C, 2), dtype=jnp.float32),
        "b_vit": jnp.zeros((1, 2), jnp.float32),
        "w_yolo": 0.1 * jax.random.normal(k_wy, (C, 2), dtype=jnp.float32),
        "b_yolo": jnp.zeros((1, 2), jnp.float32),
        "w_fc": 0.1 * jax.random.normal(k_wf, (4, num_classes), dtype=jnp.float32),
        "b_fc": jnp.zeros((1, num_classes), jnp.float32),
    }

    out = meta_model_forward(pixel_values, labels, params, size=size)
    out = jax.block_until_ready(out)
    assert out.shape == (B, num_classes)

    ref = _reference(pixel_values, params, size=size)
    max_err = float(jnp.max(jnp.abs(out - ref)))
    assert max_err < 1e-4, f"mismatch vs reference: max abs err {max_err}"
    print("KERNEL_OK")
</pallas_src>

<mosaic_0001>
module attributes {stable_mosaic.version = 11 : i64} {
  func.func @kernel(%arg0: i32, %arg1: memref<8x256xf32, #tpu.memory_space<vmem>>, %arg2: memref<8x512xf32, #tpu.memory_space<vmem>>, %arg3: memref<24x128xf32, #tpu.memory_space<vmem>>, %arg4: memref<2x8xf32, #tpu.memory_space<vmem>>, %arg5: memref<2x128xf32, #tpu.memory_space<vmem>>, %arg6: memref<8x1xf32, #tpu.memory_space<vmem>>, %arg7: memref<8x1xf32, #tpu.memory_space<vmem>>) attributes {dimension_semantics = [#tpu.dimension_semantics<arbitrary>], iteration_bounds = array<i64: 1>, scalar_prefetch = 0 : i64, scratch_operands = 2 : i64, tpu.core_type = #tpu.core_type<tc>, window_params = [{pipeline_mode = #tpu.pipeline_mode<synchronous>, transform_indices = @transform_0, window_bounds = array<i64: 8, 256>}, {transform_indices = @transform_1, window_bounds = array<i64: 8, 512>}, {pipeline_mode = #tpu.pipeline_mode<synchronous>, transform_indices = @transform_2, window_bounds = array<i64: 24, 128>}, {pipeline_mode = #tpu.pipeline_mode<synchronous>, transform_indices = @transform_3, window_bounds = array<i64: 2, 8>}, {pipeline_mode = #tpu.pipeline_mode<synchronous>, transform_indices = @transform_4, window_bounds = array<i64: 2, 128>}]} {
    %c0_i32 = arith.constant 0 : i32
    %0 = arith.cmpi eq, %arg0, %c0_i32 : i32
    %1 = arith.extui %0 : i1 to i32
    %c0_i32_0 = arith.constant 0 : i32
    %2 = arith.cmpi ne, %1, %c0_i32_0 : i32
    scf.if %2 {
      %c0_8 = arith.constant 0 : index
      %c0_9 = arith.constant 0 : index
      %12 = vector.load %arg1[%c0_8, %c0_9] : memref<8x256xf32, #tpu.memory_space<vmem>>, vector<8x256xf32>
      %cst_10 = arith.constant dense<0.000000e+00> : vector<8xf32>
      %13 = vector.multi_reduction <add>, %12, %cst_10 [1] : vector<8x256xf32> to vector<8xf32>
      %14 = vector.shape_cast %13 : vector<8xf32> to vector<8x1xf32>
      %c0_11 = arith.constant 0 : index
      %c0_12 = arith.constant 0 : index
      %15 = vector.load %arg6[%c0_11, %c0_12] : memref<8x1xf32, #tpu.memory_space<vmem>>, vector<8x1xf32>
      tpu.vector_store %arg6[%c0_11, %c0_12], %14 {strides = array<i32>} : memref<8x1xf32, #tpu.memory_space<vmem>>, vector<8x1xf32>,
      %cst_13 = arith.constant 0.000000e+00 : f32
      %16 = vector.broadcast %cst_13 : f32 to vector<8x1xf32>
      %c0_14 = arith.constant 0 : index
      %c0_15 = arith.constant 0 : index
      %17 = vector.load %arg7[%c0_14, %c0_15] : memref<8x1xf32, #tpu.memory_space<vmem>>, vector<8x1xf32>
      tpu.vector_store %arg7[%c0_14, %c0_15], %16 {strides = array<i32>} : memref<8x1xf32, #tpu.memory_space<vmem>>, vector<8x1xf32>,
    } else {
    }
    %c0 = arith.constant 0 : index
    %c0_1 = arith.constant 0 : index
    %3 = vector.load %arg7[%c0, %c0_1] : memref<8x1xf32, #tpu.memory_space<vmem>>, vector<8x1xf32>
    %c0_2 = arith.constant 0 : index
    %c0_3 = arith.constant 0 : index
    %4 = vector.load %arg2[%c0_2, %c0_3] : memref<8x512xf32, #tpu.memory_space<vmem>>, vector<8x512xf32>
    %cst = arith.constant dense<0.000000e+00> : vector<8xf32>
    %5 = vector.multi_reduction <add>, %4, %cst [1] : vector<8x512xf32> to vector<8xf32>
    %6 = vector.shape_cast %5 : vector<8xf32> to vector<8x1xf32>
    %7 = arith.addf %3, %6 : vector<8x1xf32>
    %c0_4 = arith.constant 0 : index
    %c0_5 = arith.constant 0 : index
    %8 = vector.load %arg7[%c0_4, %c0_5] : memref<8x1xf32, #tpu.memory_space<vmem>>, vector<8x1xf32>
    tpu.vector_store %arg7[%c0_4, %c0_5], %7 {strides = array<i32>} : memref<8x1xf32, #tpu.memory_space<vmem>>, vector<8x1xf32>,
    %c0_i32_6 = arith.constant 0 : i32
    %9 = arith.cmpi eq, %arg0, %c0_i32_6 : i32
    %10 = arith.extui %9 : i1 to i32
    %c0_i32_7 = arith.constant 0 : i32
    %11 = arith.cmpi ne, %10, %c0_i32_7 : i32
    scf.if %11 {
      %c0_8 = arith.constant 0 : index
      %c0_9 = arith.constant 0 : index
      %12 = vector.load %arg3[%c0_8, %c0_9] : memref<24x128xf32, #tpu.memory_space<vmem>>, vector<24x128xf32>
      %13 = vector.extract_strided_slice %12 {offsets = [0, 0], sizes = [8, 128], strides = [1, 1]} : vector<24x128xf32> to vector<8x128xf32>
      %14 = vector.extract_strided_slice %12 {offsets = [8, 0], sizes = [8, 128], strides = [1, 1]} : vector<24x128xf32> to vector<8x128xf32>
      %15 = vector.extract_strided_slice %12 {offsets = [16, 0], sizes = [1, 128], strides = [1, 1]} : vector<24x128xf32> to vector<1x128xf32>
      %c0_10 = arith.constant 0 : index
      %c0_11 = arith.constant 0 : index
      %16 = vector.load %arg6[%c0_10, %c0_11] : memref<8x1xf32, #tpu.memory_space<vmem>>, vector<8x1xf32>
      %17 = vector.broadcast %16 : vector<8x1xf32> to vector<8x128xf32>
      %18 = arith.mulf %17, %13 : vector<8x128xf32>
      %c0_12 = arith.constant 0 : index
      %c0_13 = arith.constant 0 : index
      %19 = vector.load %arg7[%c0_12, %c0_13] : memref<8x1xf32, #tpu.memory_space<vmem>>, vector<8x1xf32>
      %20 = vector.broadcast %19 : vector<8x1xf32> to vector<8x128xf32>
      %21 = arith.mulf %20, %14 : vector<8x128xf32>
      %22 = arith.addf %18, %21 : vector<8x128xf32>
      %c0_14 = arith.constant 0 : index
      %c0_15 = arith.constant 0 : index
      %23 = vector.load %arg4[%c0_14, %c0_15] : memref<2x8xf32, #tpu.memory_space<vmem>>, vector<2x8xf32>
      %cst_16 = arith.constant dense<0.000000e+00> : vector<2x128xf32>
      %24 = tpu.matmul %23, %22, %cst_16 {dimension_numbers = #tpu.dot_dimension_numbers<[1], [0], [0], [1], [0, 0, 1, 1], [], []>} : vector<2x8xf32>, vector<8x128xf32>, vector<2x128xf32> -> vector<2x128xf32>
      %25 = vector.broadcast %15 : vector<1x128xf32> to vector<2x128xf32>
      %26 = arith.addf %24, %25 : vector<2x128xf32>
      %c0_17 = arith.constant 0 : index
      %c0_18 = arith.constant 0 : index
      %27 = vector.load %arg5[%c0_17, %c0_18] : memref<2x128xf32, #tpu.memory_space<vmem>>, vector<2x128xf32>
      tpu.vector_store %arg5[%c0_17, %c0_18], %26 {strides = array<i32>} : memref<2x128xf32, #tpu.memory_space<vmem>>, vector<2x128xf32>,
    } else {
    }
    return
  }
  func.func @transform_0(%arg0: i32) -> (i32, i32) {
    %c0_i32 = arith.constant 0 : i32
    %c0_i32_0 = arith.constant 0 : i32
    %c0_i32_1 = arith.constant 0 : i32
    return %c0_i32, %c0_i32_0 : i32, i32
  }
  func.func @transform_1(%arg0: i32) -> (i32, i32) {
    %c0_i32 = arith.constant 0 : i32
    %c0_i32_0 = arith.constant 0 : i32
    return %c0_i32, %arg0 : i32, i32
  }
  func.func @transform_2(%arg0: i32) -> (i32, i32) {
    %c0_i32 = arith.constant 0 : i32
    %c0_i32_0 = arith.constant 0 : i32
    %c0_i32_1 = arith.constant 0 : i32
    return %c0_i32, %c0_i32_0 : i32, i32
  }
  func.func @transform_3(%arg0: i32) -> (i32, i32) {
    %c0_i32 = arith.constant 0 : i32
    %c0_i32_0 = arith.constant 0 : i32
    %c0_i32_1 = arith.constant 0 : i32
    return %c0_i32, %c0_i32_0 : i32, i32
  }
  func.func @transform_4(%arg0: i32) -> (i32, i32) {
    %c0_i32 = arith.constant 0 : i32
    %c0_i32_0 = arith.constant 0 : i32
    %c0_i32_1 = arith.constant 0 : i32
    return %c0_i32, %c0_i32_0 : i32, i32
  }
}

</mosaic_0001>

<llo_original>
// kernel: tpu_custom_call.1
$region0: #{tpu_custom_call.1}
  #allocation0 [shape = 'u32[]', space=smem, size = 0x4, offset = 0x4, fixed_abs, tag = 'smem constant byte address 0x4 - core index']
  #allocation1 [shape = 'u32[144,128]{1,0:T(1,128)}', space=vmem, size = 0x12000, scoped, tag = 'internal scratch']
  #allocation2 [shape = 'f32[8,1]{1,0:T(8,128)}', space=vmem, size = 0x1000, scoped, tag = 'scratch operand']
  #allocation3 [shape = 'f32[8,1]{1,0:T(8,128)}', space=vmem, size = 0x1000, scoped, tag = 'scratch operand']
  %s0 = inlined_call_operand.hbm [shape: f32[8,256], index: 0, kind: input, shape index: {}]
  %s1 = inlined_call_operand.hbm [shape: f32[8,512], index: 1, kind: input, shape index: {}]
  %s2 = inlined_call_operand.hbm [shape: f32[24,128], index: 2, kind: input, shape index: {}]
  %s3 = inlined_call_operand.hbm [shape: f32[2,8], index: 3, kind: input, shape index: {}]
  %s4 = inlined_call_operand.hbm [shape: f32[2,128], index: 4, kind: output, shape index: {}]
  %s5 = sld [smem:[#allocation0]]
  $region50: #{tpu_custom_call.1} parent=0
    _
  %s7 = ssub.s32 1, %s5
  %s8 = scalar_select 0, %s7, %s5
  $region1: #{tpu_custom_call.1} parent=0
    #allocation4 [shape = 'u8[8192]{0}', space=vmem, size = 0x2000, scoped, tag = 'input window, operand 0, single buffered']
    #allocation5 [shape = 's32[1]{0}', space=sflag, size = 0x4, scoped, tag = 'scoped memory for tpu_custom_call.1']
    #allocation6 [shape = 's32[1]{0}', space=sflag, size = 0x4, scoped, tag = 'scoped memory for tpu_custom_call.1']
    #allocation7 [shape = 'u8[16384]{0}', space=vmem, size = 0x4000, scoped, tag = 'input window, operand 1, single buffered']
    #allocation8 [shape = 's32[1]{0}', space=sflag, size = 0x4, scoped, tag = 'scoped memory for tpu_custom_call.1']
    #allocation9 [shape = 'u8[12288]{0}', space=vmem, size = 0x3000, scoped, tag = 'input window, operand 2, single buffered']
    #allocation10 [shape = 'u8[1024]{0}', space=vmem, size = 0x400, scoped, tag = 'input window, operand 3, single buffered']
    #allocation11 [shape = 's32[1]{0}', space=sflag, size = 0x4, scoped, tag = 'scoped memory for tpu_custom_call.1']
    #allocation12 [shape = 'u8[1024]{0}', space=vmem, size = 0x400, scoped, tag = 'output window, operand 0, single buffered']
    %9 = vsyncpa [#allocation5], 0
    %10 = vsyncpa [#allocation8], 0
    %11 = vsyncpa [#allocation11], 0
    %12 = vsyncpa [#allocation6], 0
    // Predicated region
    $region2: #{tpu_custom_call.1} parent=1 // pred_check
      _
    $region3: #{tpu_custom_call.1} parent=1 // pred_check_branch
      %14 = sbr.rel (0) target = $region5
    $region4: #{tpu_custom_call.1} parent=1 // pred_region
      %s16 = ssub.s32 256, 256
      %17 = vsyncadd [#allocation5], %s16
      %s19 = sshll.u32 [#allocation4], 4
      %s20 = int_to_ptr.vmem [resolvable:$true] %s19
      %22 = dma.hbm_to_vmem [thread:$0]  %s0, 256, %s20, [#allocation5]
    $region5: #{tpu_custom_call.1} parent=1 // pred_fallthru
      _
    // Predicated region
    $region6: #{tpu_custom_call.1} parent=1 // pred_check
      _
    $region7: #{tpu_custom_call.1} parent=1 // pred_check_branch
      %24 = sbr.rel (0) target = $region9
    $region8: #{tpu_custom_call.1} parent=1 // pred_region
      %s26 = ssub.s32 512, 512
      %27 = vsyncadd [#allocation8], %s26
      %s29 = sshll.u32 [#allocation7], 4
      %s30 = int_to_ptr.vmem [resolvable:$true] %s29
      %32 = dma.hbm_to_vmem [thread:$0]  %s1, 512, %s30, [#allocation8]
    $region9: #{tpu_custom_call.1} parent=1 // pred_fallthru
      _
    // Predicated region
    $region10: #{tpu_custom_call.1} parent=1 // pred_check
      _
    $region11: #{tpu_custom_call.1} parent=1 // pred_check_branch
      %34 = sbr.rel (0) target = $region13
    $region12: #{tpu_custom_call.1} parent=1 // pred_region
      %s36 = ssub.s32 384, 384
      %37 = vsyncadd [#allocation8], %s36
      %s38 = sshll.u32 [#allocation9], 4
      %s39 = int_to_ptr.vmem [resolvable:$true] %s38
      %44 = dma.hbm_to_vmem [thread:$0]  %s2, 384, %s39, [#allocation8], 128, 128, 8
    $region13: #{tpu_custom_call.1} parent=1 // pred_fallthru
      _
    // Predicated region
    $region14: #{tpu_custom_call.1} parent=1 // pred_check
      _
    $region15: #{tpu_custom_call.1} parent=1 // pred_check_branch
      %46 = sbr.rel (0) target = $region17
    $region16: #{tpu_custom_call.1} parent=1 // pred_region
      %s48 = ssub.s32 32, 32
      %49 = vsyncadd [#allocation11], %s48
      %s51 = sshll.u32 [#allocation10], 4
      %s52 = int_to_ptr.vmem [resolvable:$true] %s51
      %54 = dma.hbm_to_vmem [thread:$0]  %s3, 32, %s52, [#allocation11]
    $region17: #{tpu_custom_call.1} parent=1 // pred_fallthru
      _
    // Predicated region
    $region18: #{tpu_custom_call.1} parent=1 // pred_check
      _
    $region19: #{tpu_custom_call.1} parent=1 // pred_check_branch
      %56 = sbr.rel (0) target = $region21
    $region20: #{tpu_custom_call.1} parent=1 // pred_region
      %57 = dma.done [#allocation5], 256
    $region21: #{tpu_custom_call.1} parent=1 // pred_fallthru
      _
    // Predicated region
    $region22: #{tpu_custom_call.1} parent=1 // pred_check
      _
    $region23: #{tpu_custom_call.1} parent=1 // pred_check_branch
      %59 = sbr.rel (0) target = $region25
    $region24: #{tpu_custom_call.1} parent=1 // pred_region
      %60 = dma.done [#allocation8], 512
    $region25: #{tpu_custom_call.1} parent=1 // pred_fallthru
      _
    // Predicated region
    $region26: #{tpu_custom_call.1} parent=1 // pred_check
      _
    $region27: #{tpu_custom_call.1} parent=1 // pred_check_branch
      %62 = sbr.rel (0) target = $region29
    $region28: #{tpu_custom_call.1} parent=1 // pred_region
      %63 = dma.done [#allocation8], 384
    $region29: #{tpu_custom_call.1} parent=1 // pred_fallthru
      _
    // Predicated region
    $region30: #{tpu_custom_call.1} parent=1 // pred_check
      _
    $region31: #{tpu_custom_call.1} parent=1 // pred_check_branch
      %65 = sbr.rel (0) target = $region33
    $region32: #{tpu_custom_call.1} parent=1 // pred_region
      %66 = dma.done [#allocation11], 32
    $region33: #{tpu_custom_call.1} parent=1 // pred_fallthru
      _
    %p67 = scmp.eq.s32.totalorder 0, 0
    // Predicated region
    $region34: #{tpu_custom_call.1} parent=1 // pred_check
      %p68 = pneg %p67
    $region35: #{tpu_custom_call.1} parent=1 // pred_check_branch
      %70 = sbr.rel (%p68) target = $region37
    $region36: #{tpu_custom_call.1} parent=1 // pred_region
      %v71 = vld [vmem:[#allocation4] sm:$0xff]
      %v72 = vld [vmem:[#allocation4 + $0x8] sm:$0xff]
      %v73 = vadd.f32 %v71, %v72
      %74 = vadd.xlane.f32.xlu0 %v73
      %v75 = vpop.xlane.xlu0 %74
      %vm76 = vcmask 7168
      %77 = vst.msk [vmem:[#allocation2] sm:$0xff] %vm76, %v75
      %78 = vst.msk [vmem:[#allocation3] sm:$0xff] %vm76, 0.0
    $region37: #{tpu_custom_call.1} parent=1 // pred_fallthru
      _
    %v79 = vld [vmem:[#allocation3] sm:$0xff]
    %v80 = vld [vmem:[#allocation7] sm:$0xff]
    %v81 = vld [vmem:[#allocation7 + $0x8] sm:$0xff]
    %v82 = vld [vmem:[#allocation7 + $0x10] sm:$0xff]
    %v83 = vld [vmem:[#allocation7 + $0x18] sm:$0xff]
    %v84 = vadd.f32 %v80, %v81
    %v85 = vadd.f32 %v84, %v82
    %v86 = vadd.f32 %v85, %v83
    %87 = vadd.xlane.f32.xlu0 %v86
    %v88 = vpop.xlane.xlu0 %87
    %v89 = vadd.f32 %v79, %v88
    %vm90 = vcmask 7168
    %91 = vst.msk [vmem:[#allocation3] sm:$0xff] %vm90, %v89
    // Predicated region
    $region38: #{tpu_custom_call.1} parent=1 // pred_check
      %p92 = pneg %p67
    $region39: #{tpu_custom_call.1} parent=1 // pred_check_branch
      %94 = sbr.rel (%p92) target = $region41
    $region40: #{tpu_custom_call.1} parent=1 // pred_region
      %v95 = vld [vmem:[#allocation9] sm:$0xff]
      %v96 = vld [vmem:[#allocation9 + $0x8] sm:$0xff]
      %v97 = vld [vmem:[#allocation9 + $0x10] sm:$0xff]
      %v98 = vld [vmem:[#allocation2] sm:$0xff]
      %100 = vset.pattern.permute.xlu0 0
      %101 = vperm.xlu0 %100, %v98
      %v102 = vpop.permute.xlu0 %101
      %v104 = vmul.f32 %v102, %v95
      %v105 = vld [vmem:[#allocation3] sm:$0xff]
      %107 = vset.pattern.permute.xlu0 0
      %108 = vperm.xlu0 %107, %v105
      %v109 = vpop.permute.xlu0 %108
      %v111 = vmul.f32 %v109, %v96
      %v112 = vadd.f32 %v104, %v111
      %v113 = vld [vmem:[#allocation10] sm:$0x3]
      %v114 = vlaneseq
      %v115 = vshrl.u32 %v114, 7
      %v116 = vsub.s32 0, %v115
      %v117 = vrot.slane %v97, %v116
      %vm118 = vcmask 64512
      %v120 = vsel %vm118, %v113, 0
      %122 = vmatprep.subr.mxu0 0.0
      %123 = vmatpush1.msra.mxu0 %v112
      %124 = vmatprep.subr.mxu0 0.0
      %125 = vmatpush1.msra.mxu0 0.0
      %126 = vmatprep.subr.mxu0 0.0
      %127 = vmatpush1.msra.mxu0 0.0
      %128 = vmatprep.subr.mxu0 0.0
      %129 = vmatpush1.msra.mxu0 0.0
      %130 = vmatprep.subr.mxu0 0.0
      %131 = vmatpush1.msra.mxu0 0.0
      %132 = vmatprep.subr.mxu0 0.0
      %133 = vmatpush1.msra.mxu0 0.0
      %134 = vmatprep.subr.mxu0 0.0
      %135 = vmatpush1.msra.mxu0 0.0
      %136 = vmatprep.subr.mxu0 0.0
      %137 = vmatpush1.msra.mxu0 0.0
      %138 = vmatprep.subr.mxu0 0.0
      %139 = vmatpush1.msra.mxu0 0.0
      %140 = vmatprep.subr.mxu0 0.0
      %141 = vmatpush1.msra.mxu0 0.0
      %142 = vmatprep.subr.mxu0 0.0
      %143 = vmatpush1.msra.mxu0 0.0
      %144 = vmatprep.subr.mxu0 0.0
      %145 = vmatpush1.msra.mxu0 0.0
      %146 = vmatprep.subr.mxu0 0.0
      %147 = vmatpush1.msra.mxu0 0.0
      %148 = vmatprep.subr.mxu0 0.0
      %149 = vmatpush1.msra.mxu0 0.0
      %150 = vmatprep.subr.mxu0 0.0
      %151 = vmatpush1.msra.mxu0 0.0
      %152 = vmatprep.subr.mxu0 0.0
      %153 = vmatpush1.msra.mxu0 0.0
      %154 = vmatprep.subr.mxu0 0.0
      %155 = vmatpush1.msra.mxu0 0.0
      %156 = vmatprep.subr.mxu0 0.0
      %157 = vmatpush1.msra.mxu0 0.0
      %158 = vmatprep.subr.mxu0 0.0
      %159 = vmatpush1.msra.mxu0 0.0
      %160 = vmatprep.subr.mxu0 0.0
      %161 = vmatpush1.msra.mxu0 0.0
      %162 = vmatprep.subr.mxu0 0.0
      %163 = vmatpush1.msra.mxu0 0.0
      %164 = vmatprep.subr.mxu0 0.0
      %165 = vmatpush1.msra.mxu0 0.0
      %166 = vmatprep.subr.mxu0 0.0
      %167 = vmatpush1.msra.mxu0 0.0
      %168 = vmatprep.subr.mxu0 0.0
      %169 = vmatpush1.msra.mxu0 0.0
      %170 = vmatprep.subr.mxu0 0.0
      %171 = vmatpush1.msra.mxu0 0.0
      %172 = vmatprep.subr.mxu0 0.0
      %173 = vmatpush1.msra.mxu0 0.0
      %174 = vmatprep.subr.mxu0 0.0
      %175 = vmatpush1.msra.mxu0 0.0
      %176 = vmatprep.subr.mxu0 0.0
      %177 = vmatpush1.msra.mxu0 0.0
      %178 = vmatprep.subr.mxu0 0.0
      %179 = vmatpush1.msra.mxu0 0.0
      %180 = vmatprep.subr.mxu0 0.0
      %181 = vmatpush1.msra.mxu0 0.0
      %182 = vmatprep.subr.mxu0 0.0
      %183 = vmatpush1.msra.mxu0 0.0
      %184 = vmatprep.subr.mxu0 0.0
      %185 = vmatpush1.msra.mxu0 0.0
      %186 = vmatprep.mubr.f32.mxu0 0.0
      %187 = vmatmul.mubr.f32.gmra.mrb[0].mxu0 %v120
      %v188 = vpop.f32.mrb[0].mxu0
      %v189 = vadd.f32 %v117, %v188
      %v190 = vpop.f32.mrb[0].mxu0
      %191 = vdwg.mxu0
      %192 = vst [vmem:[#allocation12] sm:$0x3] %v189
    $region41: #{tpu_custom_call.1} parent=1 // pred_fallthru
      _
    // Predicated region
    $region42: #{tpu_custom_call.1} parent=1 // pred_check
      _
    $region43: #{tpu_custom_call.1} parent=1 // pred_check_branch
      %194 = sbr.rel (0) target = $region45
    $region44: #{tpu_custom_call.1} parent=1 // pred_region
      %s196 = ssub.s32 32, 32
      %197 = vsyncadd [#allocation6], %s196
      %s199 = sshll.u32 [#allocation12], 4
      %s200 = int_to_ptr.vmem [resolvable:$true] %s199
      %202 = dma.vmem_to_hbm [thread:$0]  %s200, 32, %s4, [#allocation6]
    $region45: #{tpu_custom_call.1} parent=1 // pred_fallthru
      _
    // Predicated region
    $region46: #{tpu_custom_call.1} parent=1 // pred_check
      _
    $region47: #{tpu_custom_call.1} parent=1 // pred_check_branch
      %204 = sbr.rel (0) target = $region49
    $region48: #{tpu_custom_call.1} parent=1 // pred_region
      %205 = dma.done [#allocation6], 32
    $region49: #{tpu_custom_call.1} parent=1 // pred_fallthru
      _
    %206 = vsyncpa [#allocation5], 1
    %207 = vsyncpa [#allocation8], 1
    %208 = vsyncpa [#allocation11], 1
    %209 = vsyncpa [#allocation6], 1

</llo_original>
